<compile_context>
chip_gen: v7x
topology: tpu7x:2x2x1
jax: 0.10.0
libtpu: 0.0.40
codegen_flags: <defaults>
</compile_context>

<pallas_src>
import jax
import jax.numpy as jnp
from jax.experimental import pallas as pl
from jax.experimental.pallas import tpu as pltpu

FRAME_SHIFT = int(16000 * 0.02)   # 320 samples per frame (20 ms @ 16 kHz)
_FOLD = 8                         # time samples folded into the sublane axis


def _length_kernel(mask_ref, out_ref, acc_ref):
    """mask_ref: (B, 8, t_tile) narrow-int block; acc_ref: (B, 8) int32."""
    k = pl.program_id(0)

    @pl.when(k == 0)
    def _():
        acc_ref[...] = jnp.zeros_like(acc_ref)

    # Widen in-register (cheap VPU filler under the DMA) and lane-reduce (XLU).
    m = mask_ref[...].astype(jnp.int32)          # (B, 8, t_tile)
    acc_ref[...] += jnp.sum(m, axis=2)           # (B, 8) int32, exact

    @pl.when(k == pl.num_programs(0) - 1)
    def _():
        wav = jnp.sum(acc_ref[...], axis=1, keepdims=True)   # (B, 1) int32
        num = wav - 1
        # Exact floor(num / 320) without vector integer division:
        # the f32 quotient is within <1 of the true quotient over the int32
        # range; an integer remainder check fixes any rounding. Handles
        # num == -1 (all-padding rows) -> feat 0, matching torch floor mode.
        q = jnp.floor(num.astype(jnp.float32) / float(FRAME_SHIFT)).astype(jnp.int32)
        r = num - q * FRAME_SHIFT
        q = jnp.where(r < 0, q - 1, q)
        q = jnp.where(r >= FRAME_SHIFT, q + 1, q)
        out_ref[...] = q + 1


def _round_up(x, m):
    return -(-x // m) * m


def compute_length_from_mask(mask, *, max_block_bytes=8 * 1024 * 1024):
    """mask: (B, T) array of 0/1 (bool/int8/int32/float...). Returns (B, 1) int32."""
    B, T = mask.shape

    # Keep the narrowest HBM representation; carry bool as int8.
    if mask.dtype == jnp.bool_:
        mask = mask.astype(jnp.int8)
    itemsize = jnp.dtype(mask.dtype).itemsize

    F = _FOLD
    # Lanes available per block under the per-buffer VMEM budget.
    budget_lanes = max(128, max_block_bytes // (B * F * itemsize))

    if T % F == 0 and (T // F) <= budget_lanes:
        # Whole (folded) mask fits in one block: no padding, single grid step.
        t_tile = T // F
        mask3 = mask.reshape(B, F, t_tile)
        grid = (1,)
    else:
        # Evenly sized, 128-aligned time tiles; pad the tail with zeros
        # (zero padding is semantically a no-op for a 0/1 mask). Callers with
        # aligned T avoid the one-time pad copy.
        t8 = -(-T // F)                         # ceil(T / F)
        n_steps = -(-t8 // budget_lanes)
        t_tile = _round_up(-(-t8 // n_steps), 128)
        chunk = F * t_tile
        T_pad = _round_up(T, chunk)
        if T_pad != T:
            mask = jnp.pad(mask, ((0, 0), (0, T_pad - T)))
        mask3 = mask.reshape(B, F, T_pad // F)
        grid = (T_pad // chunk,)

    block_bytes = B * F * t_tile * itemsize
    # Double-buffered input block + small headroom; with the default 8 MiB
    # per-buffer budget this stays well under the v7x 64 MiB physical VMEM
    # and above v5e's 16 MiB scoped default.
    vmem_limit = int(2 * block_bytes + (4 << 20))

    return pl.pallas_call(
        _length_kernel,
        out_shape=jax.ShapeDtypeStruct((B, 1), jnp.int32),
        grid_spec=pltpu.PrefetchScalarGridSpec(
            num_scalar_prefetch=0,
            grid=grid,
            in_specs=[pl.BlockSpec((B, F, t_tile), lambda k: (0, 0, k))],
            out_specs=pl.BlockSpec((B, 1), lambda k: (0, 0)),
            scratch_shapes=[pltpu.VMEM((B, F), jnp.int32)],
        ),
        compiler_params=pltpu.CompilerParams(
            dimension_semantics=("arbitrary",),
            vmem_limit_bytes=vmem_limit),
    )(mask3)


# TODO(synk): Pooling.forward raises NotImplementedError in the reference
# module, so there is no pooling compute to lower; only
# compute_length_from_mask is implemented.


if __name__ == "__main__":
    key = jax.random.PRNGKey(0)

    def ref_lengths(mask):
        wav = jnp.sum(mask.astype(jnp.int32), axis=1)
        return ((wav - 1) // FRAME_SHIFT + 1).astype(jnp.int32)

    # Case 1: aligned T, random valid lengths, narrow int8 mask (single block).
    B, T = 2, 6400
    lens = jax.random.randint(key, (B,), 1, T + 1, dtype=jnp.int32)
    idx = jnp.arange(T, dtype=jnp.int32)[None, :]
    mask1 = (idx < lens[:, None]).astype(jnp.int8)          # (B, T) of 0/1
    out1 = jax.block_until_ready(compute_length_from_mask(mask1))
    assert out1.shape == (B, 1)
    assert bool(jnp.all(out1[:, 0] == ref_lengths(mask1)))

    # Case 2: unaligned T and an all-padding row (exercises zero-pad path and
    # the wav_lens == 0 -> 0 edge case).
    T2 = 5003
    lens2 = jnp.array([T2, 0], dtype=jnp.int32)
    idx2 = jnp.arange(T2, dtype=jnp.int32)[None, :]
    mask2 = (idx2 < lens2[:, None]).astype(jnp.int8)
    out2 = jax.block_until_ready(compute_length_from_mask(mask2))
    assert bool(jnp.all(out2[:, 0] == ref_lengths(mask2)))

    # Case 3: force a small per-buffer budget to exercise the multi-step grid
    # and the cross-step int32 accumulator.
    out3 = jax.block_until_ready(
        compute_length_from_mask(mask1, max_block_bytes=4096))
    assert bool(jnp.all(out3[:, 0] == ref_lengths(mask1)))

    print("KERNEL_OK")
</pallas_src>

<mosaic_0001>
module attributes {stable_mosaic.version = 11 : i64} {
  func.func @_length_kernel(%arg0: i32, %arg1: memref<2x8x800xi8, #tpu.memory_space<vmem>>, %arg2: memref<2x1xi32, #tpu.memory_space<vmem>>, %arg3: memref<2x8xi32, #tpu.memory_space<vmem>>) attributes {dimension_semantics = [#tpu.dimension_semantics<arbitrary>], iteration_bounds = array<i64: 1>, scalar_prefetch = 0 : i64, scratch_operands = 1 : i64, tpu.core_type = #tpu.core_type<tc>, window_params = [{transform_indices = @transform_0, window_bounds = array<i64: 2, 8, 800>}, {pipeline_mode = #tpu.pipeline_mode<synchronous>, transform_indices = @transform_1, window_bounds = array<i64: 2, 1>}]} {
    %c0_i32 = arith.constant 0 : i32
    %0 = arith.cmpi eq, %arg0, %c0_i32 : i32
    %1 = arith.extui %0 : i1 to i32
    %c0_i32_0 = arith.constant 0 : i32
    %2 = arith.cmpi ne, %1, %c0_i32_0 : i32
    scf.if %2 {
      %c0_i32_9 = arith.constant 0 : i32
      %12 = vector.broadcast %c0_i32_9 : i32 to vector<2x8xi32>
      %c0_10 = arith.constant 0 : index
      %c0_11 = arith.constant 0 : index
      %13 = vector.load %arg3[%c0_10, %c0_11] : memref<2x8xi32, #tpu.memory_space<vmem>>, vector<2x8xi32>
      tpu.vector_store %arg3[%c0_10, %c0_11], %12 {strides = array<i32>} : memref<2x8xi32, #tpu.memory_space<vmem>>, vector<2x8xi32>,
    } else {
    }
    %c0 = arith.constant 0 : index
    %c0_1 = arith.constant 0 : index
    %c0_2 = arith.constant 0 : index
    %3 = vector.load %arg1[%c0, %c0_1, %c0_2] : memref<2x8x800xi8, #tpu.memory_space<vmem>>, vector<2x8x800xi8>
    %4 = arith.extsi %3 : vector<2x8x800xi8> to vector<2x8x800xi32>
    %c0_3 = arith.constant 0 : index
    %c0_4 = arith.constant 0 : index
    %5 = vector.load %arg3[%c0_3, %c0_4] : memref<2x8xi32, #tpu.memory_space<vmem>>, vector<2x8xi32>
    %cst = arith.constant dense<0> : vector<2x8xi32>
    %6 = vector.multi_reduction <add>, %4, %cst [2] : vector<2x8x800xi32> to vector<2x8xi32>
    %7 = arith.addi %5, %6 : vector<2x8xi32>
    %c0_5 = arith.constant 0 : index
    %c0_6 = arith.constant 0 : index
    %8 = vector.load %arg3[%c0_5, %c0_6] : memref<2x8xi32, #tpu.memory_space<vmem>>, vector<2x8xi32>
    tpu.vector_store %arg3[%c0_5, %c0_6], %7 {strides = array<i32>} : memref<2x8xi32, #tpu.memory_space<vmem>>, vector<2x8xi32>,
    %c0_i32_7 = arith.constant 0 : i32
    %9 = arith.cmpi eq, %arg0, %c0_i32_7 : i32
    %10 = arith.extui %9 : i1 to i32
    %c0_i32_8 = arith.constant 0 : i32
    %11 = arith.cmpi ne, %10, %c0_i32_8 : i32
    scf.if %11 {
      %c0_9 = arith.constant 0 : index
      %c0_10 = arith.constant 0 : index
      %12 = vector.load %arg3[%c0_9, %c0_10] : memref<2x8xi32, #tpu.memory_space<vmem>>, vector<2x8xi32>
      %cst_11 = arith.constant dense<0> : vector<2xi32>
      %13 = vector.multi_reduction <add>, %12, %cst_11 [1] : vector<2x8xi32> to vector<2xi32>
      %14 = vector.shape_cast %13 : vector<2xi32> to vector<2x1xi32>
      %c1_i32 = arith.constant 1 : i32
      %15 = vector.broadcast %c1_i32 : i32 to vector<2x1xi32>
      %16 = arith.subi %14, %15 : vector<2x1xi32>
      %17 = arith.sitofp %16 : vector<2x1xi32> to vector<2x1xf32>
      %cst_12 = arith.constant 3.200000e+02 : f32
      %18 = vector.broadcast %cst_12 : f32 to vector<2x1xf32>
      %19 = arith.divf %17, %18 : vector<2x1xf32>
      %20 = math.floor %19 : vector<2x1xf32>
      %21 = arith.fptosi %20 : vector<2x1xf32> to vector<2x1xi32>
      %c320_i32 = arith.constant 320 : i32
      %22 = vector.broadcast %c320_i32 : i32 to vector<2x1xi32>
      %23 = arith.muli %21, %22 : vector<2x1xi32>
      %24 = arith.subi %16, %23 : vector<2x1xi32>
      %c0_i32_13 = arith.constant 0 : i32
      %25 = vector.broadcast %c0_i32_13 : i32 to vector<2x1xi32>
      %26 = arith.cmpi slt, %24, %25 : vector<2x1xi32>
      %c1_i32_14 = arith.constant 1 : i32
      %27 = vector.broadcast %c1_i32_14 : i32 to vector<2x1xi32>
      %28 = arith.subi %21, %27 : vector<2x1xi32>
      %29 = arith.select %26, %28, %21 : vector<2x1xi1>, vector<2x1xi32>
      %c320_i32_15 = arith.constant 320 : i32
      %30 = vector.broadcast %c320_i32_15 : i32 to vector<2x1xi32>
      %31 = arith.cmpi sge, %24, %30 : vector<2x1xi32>
      %c1_i32_16 = arith.constant 1 : i32
      %32 = vector.broadcast %c1_i32_16 : i32 to vector<2x1xi32>
      %33 = arith.addi %29, %32 : vector<2x1xi32>
      %34 = arith.select %31, %33, %29 : vector<2x1xi1>, vector<2x1xi32>
      %c1_i32_17 = arith.constant 1 : i32
      %35 = vector.broadcast %c1_i32_17 : i32 to vector<2x1xi32>
      %36 = arith.addi %34, %35 : vector<2x1xi32>
      %c0_18 = arith.constant 0 : index
      %c0_19 = arith.constant 0 : index
      %37 = vector.load %arg2[%c0_18, %c0_19] : memref<2x1xi32, #tpu.memory_space<vmem>>, vector<2x1xi32>
      tpu.vector_store %arg2[%c0_18, %c0_19], %36 {strides = array<i32>} : memref<2x1xi32, #tpu.memory_space<vmem>>, vector<2x1xi32>,
    } else {
    }
    return
  }
  func.func @transform_0(%arg0: i32) -> (i32, i32, i32) {
    %c0_i32 = arith.constant 0 : i32
    %c0_i32_0 = arith.constant 0 : i32
    %c0_i32_1 = arith.constant 0 : i32
    return %c0_i32, %c0_i32_0, %arg0 : i32, i32, i32
  }
  func.func @transform_1(%arg0: i32) -> (i32, i32) {
    %c0_i32 = arith.constant 0 : i32
    %c0_i32_0 = arith.constant 0 : i32
    %c0_i32_1 = arith.constant 0 : i32
    return %c0_i32, %c0_i32_0 : i32, i32
  }
}

</mosaic_0001>

<llo_original>
// kernel: tpu_custom_call.1
$region0: #{tpu_custom_call.1}
  #allocation0 [shape = 'u32[]', space=smem, size = 0x4, offset = 0x4, fixed_abs, tag = 'smem constant byte address 0x4 - core index']
  #allocation1 [shape = 'u32[144,128]{1,0:T(1,128)}', space=vmem, size = 0x12000, scoped, tag = 'internal scratch']
  #allocation2 [shape = 's32[2,8]{1,0:T(2,128)}', space=vmem, size = 0x400, scoped, tag = 'scratch operand']
  %s0 = inlined_call_operand.hbm [shape: s8[2,8,800], index: 0, kind: input, shape index: {}]
  %s1 = inlined_call_operand.vmem [shape: s32[2,1], index: 1, kind: output, shape index: {}]
  %s2 = sld [smem:[#allocation0]]
  $region26: #{tpu_custom_call.1} parent=0
    _
  %s4 = ssub.s32 1, %s2
  %s5 = scalar_select 0, %s4, %s2
  $region1: #{tpu_custom_call.1} parent=0
    #allocation3 [shape = 'u8[14336]{0}', space=vmem, size = 0x3800, scoped, tag = 'input window, operand 0, single buffered']
    #allocation4 [shape = 's32[1]{0}', space=sflag, size = 0x4, scoped, tag = 'scoped memory for tpu_custom_call.1']
    %6 = vsyncpa [#allocation4], 0
    // Predicated region
    $region2: #{tpu_custom_call.1} parent=1 // pred_check
      _
    $region3: #{tpu_custom_call.1} parent=1 // pred_check_branch
      %8 = sbr.rel (0) target = $region5
    $region4: #{tpu_custom_call.1} parent=1 // pred_region
      %s10 = ssub.s32 448, 448
      %11 = vsyncadd [#allocation4], %s10
      %s12 = sshll.u32 [#allocation3], 4
      %s13 = int_to_ptr.vmem [resolvable:$true] %s12
      %18 = dma.hbm_to_vmem [thread:$0]  %s0, 448, %s13, [#allocation4], 224, 224, 14
    $region5: #{tpu_custom_call.1} parent=1 // pred_fallthru
      _
    // Predicated region
    $region6: #{tpu_custom_call.1} parent=1 // pred_check
      _
    $region7: #{tpu_custom_call.1} parent=1 // pred_check_branch
      %20 = sbr.rel (0) target = $region9
    $region8: #{tpu_custom_call.1} parent=1 // pred_region
      %21 = dma.done [#allocation4], 448
    $region9: #{tpu_custom_call.1} parent=1 // pred_fallthru
      _
    %p22 = scmp.eq.s32.totalorder 0, 0
    // Predicated region
    $region10: #{tpu_custom_call.1} parent=1 // pred_check
      %p23 = pneg %p22
    $region11: #{tpu_custom_call.1} parent=1 // pred_check_branch
      %25 = sbr.rel (%p23) target = $region13
    $region12: #{tpu_custom_call.1} parent=1 // pred_region
      %vm26 = vcmask 58368
      %27 = vst.msk [vmem:[#allocation2] sm:$0x3] %vm26, 0
    $region13: #{tpu_custom_call.1} parent=1 // pred_fallthru
      _
    %v28 = vld [vmem:[#allocation3] sm:$0xff]
    %v29 = vld [vmem:[#allocation3 + $0x8] sm:$0x3f]
    %v30 = vld [vmem:[#allocation3 + $0xe] sm:$0xff]
    %v31 = vld [vmem:[#allocation3 + $0x16] sm:$0x3f]
    %v32 = vunpack.c.0.s8 %v28
    %v33 = vunpack.c.1.s8 %v28
    %v34 = vunpack.c.2.s8 %v28
    %v35 = vunpack.c.3.s8 %v28
    %v36 = vunpack.c.0.s8 %v29
    %v37 = vunpack.c.1.s8 %v29
    %v38 = vunpack.c.2.s8 %v29
    %v39 = vunpack.c.0.s8 %v30
    %v40 = vunpack.c.1.s8 %v30
    %v41 = vunpack.c.2.s8 %v30
    %v42 = vunpack.c.3.s8 %v30
    %v43 = vunpack.c.0.s8 %v31
    %v44 = vunpack.c.1.s8 %v31
    %v45 = vunpack.c.2.s8 %v31
    %v46 = vld [vmem:[#allocation2] sm:$0x3]
    %v47 = vadd.s32 %v32, %v34
    %v48 = vadd.s32 %v33, %v35
    %v49 = vadd.s32 %v47, %v36
    %v50 = vadd.s32 %v48, %v37
    %vm51 = vcmask 261120
    %v52 = vsel %vm51, %v38, 0
    %v53 = vadd.s32 %v49, %v52
    %v54 = vadd.s32 %v53, %v50
    %v55 = vand.u32 %v54, 65535
    %v56 = vshrl.u32 %v54, 16
    %v57 = vcvt.s32.f32 %v55
    %v58 = vcvt.s32.f32 %v56
    %59 = vadd.xlane.f32.xlu0 %v57
    %v60 = vpop.xlane.xlu0 %59
    %61 = vadd.xlane.f32.xlu0 %v58
    %v62 = vpop.xlane.xlu0 %61
    %v63 = vcvt.f32.s32 %v60
    %v64 = vcvt.f32.s32 %v62
    %v65 = vshll.u32 %v64, 16
    %v66 = vadd.s32 %v65, %v63
    %v67 = vadd.s32 %v39, %v41
    %v68 = vadd.s32 %v40, %v42
    %v69 = vadd.s32 %v67, %v43
    %v70 = vadd.s32 %v68, %v44
    %v71 = vsel %vm51, %v45, 0
    %v72 = vadd.s32 %v69, %v71
    %v73 = vadd.s32 %v72, %v70
    %v74 = vand.u32 %v73, 65535
    %v75 = vshrl.u32 %v73, 16
    %v76 = vcvt.s32.f32 %v74
    %v77 = vcvt.s32.f32 %v75
    %78 = vadd.xlane.f32.xlu0 %v76
    %v79 = vpop.xlane.xlu0 %78
    %80 = vadd.xlane.f32.xlu0 %v77
    %v81 = vpop.xlane.xlu0 %80
    %v82 = vcvt.f32.s32 %v79
    %v83 = vcvt.f32.s32 %v81
    %v84 = vshll.u32 %v83, 16
    %v85 = vadd.s32 %v84, %v82
    %v86 = vlaneseq
    %v87 = vand.u32 %v86, 127
    %v88 = vlaneseq
    %v89 = vshrl.u32 %v88, 7
    %v90 = vsub.s32 %v87, %v89
    %v91 = vrot.slane %v66, %v90
    %v92 = vlaneseq
    %v93 = vshrl.u32 %v92, 7
    %v94 = vsub.s32 %v87, %v93
    %v95 = vrot.slane %v85, %v94
    %vm96 = vcmask 1041409
    %v97 = vsel %vm96, %v95, %v91
    %v98 = vadd.s32 %v46, %v97
    %vm99 = vcmask 58368
    %100 = vst.msk [vmem:[#allocation2] sm:$0x3] %vm99, %v98
    // Predicated region
    $region14: #{tpu_custom_call.1} parent=1 // pred_check
      %p101 = pneg %p22
    $region15: #{tpu_custom_call.1} parent=1 // pred_check_branch
      %103 = sbr.rel (%p101) target = $region17
    $region16: #{tpu_custom_call.1} parent=1 // pred_region
      %v104 = vld [vmem:[#allocation2] sm:$0x3]
      %v105 = vsel %vm99, %v104, 0
      %v106 = vand.u32 %v105, 65535
      %v107 = vshrl.u32 %v105, 16
      %v108 = vcvt.s32.f32 %v106
      %v109 = vcvt.s32.f32 %v107
      %110 = vadd.xlane.f32.xlu0 %v108
      %v111 = vpop.xlane.xlu0 %110
      %112 = vadd.xlane.f32.xlu0 %v109
      %v113 = vpop.xlane.xlu0 %112
      %v114 = vcvt.f32.s32 %v111
      %v115 = vcvt.f32.s32 %v113
      %v116 = vshll.u32 %v115, 16
      %v117 = vadd.s32 %v116, %v114
      %v118 = vsub.s32 %v117, 1
      %v119 = vcvt.s32.f32 %v118
      %v120 = vrcp.pop 320.0
      %v121 = vmul.f32 %v119, %v120
      %v122 = vfloor.f32 %v121
      %v123 = vcvt.f32.s32.to.zero.pseudo %v122
      %v124 = vmul.u32 %v123, 320
      %v125 = vsub.s32 %v118, %v124
      %vm126 = vcmp.lt.s32.totalorder %v125, 0
      %v127 = vsub.s32 %v123, 1
      %v128 = vsel %vm126, %v127, %v123
      %vm129 = vcmp.ge.s32.totalorder %v125, 320
      %v130 = vadd.s32 %v128, 1
      %v131 = vsel %vm129, %v130, %v128
      %v132 = vadd.s32 %v131, 1
      %vm133 = vcmask 1024
      %134 = vst.msk [vmem:[%s1] sm:$0x3] %vm133, %v132
    $region17: #{tpu_custom_call.1} parent=1 // pred_fallthru
      _
    // Predicated region
    $region18: #{tpu_custom_call.1} parent=1 // pred_check
      _
    $region19: #{tpu_custom_call.1} parent=1 // pred_check_branch
      %136 = sbr.rel (0) target = $region21
    $region20: #{tpu_custom_call.1} parent=1 // pred_region
      _
    $region21: #{tpu_custom_call.1} parent=1 // pred_fallthru
      _
    // Predicated region
    $region22: #{tpu_custom_call.1} parent=1 // pred_check
      _
    $region23: #{tpu_custom_call.1} parent=1 // pred_check_branch
      %138 = sbr.rel (0) target = $region25
    $region24: #{tpu_custom_call.1} parent=1 // pred_region
      _
    $region25: #{tpu_custom_call.1} parent=1 // pred_fallthru
      _
    %139 = vsyncpa [#allocation4], 1

</llo_original>
